<compile_context>
chip_gen: v5e
topology: v5e:2x2
jax: 0.10.0
libtpu: 0.0.40
codegen_flags: <defaults>
</compile_context>

<pallas_src>
import functools

import jax
import jax.numpy as jnp
from jax.experimental import pallas as pl
from jax.experimental.pallas import tpu as pltpu

_LANES = 128
_MAX_TILE_ROWS = 2048   # 2048 * 128 * 4B = 1 MiB per input block (fits v7x VMEM budget)


def _multiple_mse_kernel(o0_ref, o1_ref, t0_ref, t1_ref, loss_ref, acc_ref, *, inv_n):
    pid = pl.program_id(0)

    @pl.when(pid == 0)
    def _init():
        acc_ref[...] = jnp.zeros_like(acc_ref)

    d0 = o0_ref[...] - t0_ref[...]
    d1 = o1_ref[...] - t1_ref[...]
    # Partial reduce over the sublane (row) axis only; keep the lane axis dense so the
    # running accumulator stays a full-width vreg row.
    acc_ref[...] += jnp.sum(d0 * d0 + d1 * d1, axis=0, keepdims=True)

    @pl.when(pid == pl.num_programs(0) - 1)
    def _finalize():
        # Both component means share count B -> fused scale by 1/B (trace-time const).
        loss_ref[...] = jnp.sum(acc_ref[...], keepdims=True) * inv_n


def multiple_mse(output, target, *, max_tile_rows=_MAX_TILE_ROWS):
    """output: tuple (out0, out1) each [B, 1]; target: [B, 2]. Returns scalar f32 loss."""
    out0, out1 = output
    B = out0.shape[0]

    # Mirror `.float()` from the PyTorch module; build lane-dense operands and
    # pre-split the target components (no in-kernel lane slicing).
    o0 = out0.astype(jnp.float32).reshape(B)
    o1 = out1.astype(jnp.float32).reshape(B)
    tgt = target.astype(jnp.float32)
    t0 = tgt[:, 0]
    t1 = tgt[:, 1]

    if B % _LANES == 0:
        rows, lanes = B // _LANES, _LANES
        tile_rows = min(rows, max(int(max_tile_rows), 1))
        while rows % tile_rows:          # largest tile that evenly divides rows
            tile_rows -= 1
    else:
        # Small / irregular batch: single full-array block (full-extent exception
        # to the (8,128) rule).
        rows, lanes, tile_rows = 1, B, 1

    shape = (rows, lanes)
    o0 = o0.reshape(shape)
    o1 = o1.reshape(shape)
    t0 = t0.reshape(shape)
    t1 = t1.reshape(shape)

    grid = (rows // tile_rows,)
    in_spec = pl.BlockSpec((tile_rows, lanes), lambda i: (i, 0))
    kernel = functools.partial(_multiple_mse_kernel, inv_n=1.0 / float(B))

    loss = pl.pallas_call(
        kernel,
        out_shape=jax.ShapeDtypeStruct((1, 1), jnp.float32),
        grid_spec=pltpu.PrefetchScalarGridSpec(
            num_scalar_prefetch=0,
            grid=grid,
            in_specs=[in_spec, in_spec, in_spec, in_spec],
            out_specs=pl.BlockSpec((1, 1), lambda i: (0, 0)),
            scratch_shapes=[pltpu.VMEM((1, lanes), jnp.float32)],
        ),
        compiler_params=pltpu.CompilerParams(
            dimension_semantics=("arbitrary",),   # reduction axis
        ),
    )(o0, o1, t0, t1)
    return loss[0, 0]


def _reference(output, target):
    out0, out1 = output
    t = target.astype(jnp.float32)
    return (jnp.mean((out0.astype(jnp.float32) - t[:, 0:1]) ** 2)
            + jnp.mean((out1.astype(jnp.float32) - t[:, 1:2]) ** 2))


if __name__ == "__main__":
    key = jax.random.PRNGKey(0)
    k0, k1, k2, k3, k4, k5 = jax.random.split(key, 6)

    # Case 1: tiny batch (as in the bifurcation-FFR usage) -> single-block path.
    B_small = 8
    out0_s = jax.random.normal(k0, (B_small, 1), dtype=jnp.float32)
    out1_s = jax.random.normal(k1, (B_small, 1), dtype=jnp.float32)
    tgt_s = jax.random.normal(k2, (B_small, 2), dtype=jnp.float32)

    loss_s = jax.block_until_ready(multiple_mse((out0_s, out1_s), tgt_s))
    ref_s = _reference((out0_s, out1_s), tgt_s)
    assert jnp.allclose(loss_s, ref_s, rtol=1e-6, atol=1e-6), (loss_s, ref_s)

    # Case 2: lane-dense batch exercising the tiled grid + accumulator path
    # (max_tile_rows=8 -> rows=32 split into 4 grid steps).
    B_big = 4096
    out0_b = jax.random.normal(k3, (B_big, 1), dtype=jnp.float32)
    out1_b = jax.random.normal(k4, (B_big, 1), dtype=jnp.float32)
    tgt_b = jax.random.normal(k5, (B_big, 2), dtype=jnp.float32)

    loss_b = jax.block_until_ready(
        multiple_mse((out0_b, out1_b), tgt_b, max_tile_rows=8))
    ref_b = _reference((out0_b, out1_b), tgt_b)
    assert jnp.allclose(loss_b, ref_b, rtol=1e-5, atol=1e-5), (loss_b, ref_b)

    print("KERNEL_OK")
</pallas_src>

<mosaic_0001>
module attributes {stable_mosaic.version = 11 : i64} {
  func.func @_multiple_mse_kernel(%arg0: i32, %arg1: memref<1x8xf32, #tpu.memory_space<vmem>>, %arg2: memref<1x8xf32, #tpu.memory_space<vmem>>, %arg3: memref<1x8xf32, #tpu.memory_space<vmem>>, %arg4: memref<1x8xf32, #tpu.memory_space<vmem>>, %arg5: memref<1x1xf32, #tpu.memory_space<vmem>>, %arg6: memref<1x8xf32, #tpu.memory_space<vmem>>) attributes {dimension_semantics = [#tpu.dimension_semantics<arbitrary>], iteration_bounds = array<i64: 1>, scalar_prefetch = 0 : i64, scratch_operands = 1 : i64, tpu.core_type = #tpu.core_type<tc>, window_params = [{transform_indices = @transform_0, window_bounds = array<i64: 1, 8>}, {transform_indices = @transform_1, window_bounds = array<i64: 1, 8>}, {transform_indices = @transform_2, window_bounds = array<i64: 1, 8>}, {transform_indices = @transform_3, window_bounds = array<i64: 1, 8>}, {pipeline_mode = #tpu.pipeline_mode<synchronous>, transform_indices = @transform_4, window_bounds = array<i64: 1, 1>}]} {
    %c0_i32 = arith.constant 0 : i32
    %0 = arith.cmpi eq, %arg0, %c0_i32 : i32
    %1 = arith.extui %0 : i1 to i32
    %c0_i32_0 = arith.constant 0 : i32
    %2 = arith.cmpi ne, %1, %c0_i32_0 : i32
    scf.if %2 {
      %cst_14 = arith.constant 0.000000e+00 : f32
      %20 = vector.broadcast %cst_14 : f32 to vector<1x8xf32>
      %c0_15 = arith.constant 0 : index
      %c0_16 = arith.constant 0 : index
      %21 = vector.load %arg6[%c0_15, %c0_16] : memref<1x8xf32, #tpu.memory_space<vmem>>, vector<1x8xf32>
      tpu.vector_store %arg6[%c0_15, %c0_16], %20 {strides = array<i32>} : memref<1x8xf32, #tpu.memory_space<vmem>>, vector<1x8xf32>,
    } else {
    }
    %c0 = arith.constant 0 : index
    %c0_1 = arith.constant 0 : index
    %3 = vector.load %arg1[%c0, %c0_1] : memref<1x8xf32, #tpu.memory_space<vmem>>, vector<1x8xf32>
    %c0_2 = arith.constant 0 : index
    %c0_3 = arith.constant 0 : index
    %4 = vector.load %arg3[%c0_2, %c0_3] : memref<1x8xf32, #tpu.memory_space<vmem>>, vector<1x8xf32>
    %5 = arith.subf %3, %4 : vector<1x8xf32>
    %c0_4 = arith.constant 0 : index
    %c0_5 = arith.constant 0 : index
    %6 = vector.load %arg2[%c0_4, %c0_5] : memref<1x8xf32, #tpu.memory_space<vmem>>, vector<1x8xf32>
    %c0_6 = arith.constant 0 : index
    %c0_7 = arith.constant 0 : index
    %7 = vector.load %arg4[%c0_6, %c0_7] : memref<1x8xf32, #tpu.memory_space<vmem>>, vector<1x8xf32>
    %8 = arith.subf %6, %7 : vector<1x8xf32>
    %c0_8 = arith.constant 0 : index
    %c0_9 = arith.constant 0 : index
    %9 = vector.load %arg6[%c0_8, %c0_9] : memref<1x8xf32, #tpu.memory_space<vmem>>, vector<1x8xf32>
    %10 = arith.mulf %5, %5 : vector<1x8xf32>
    %11 = arith.mulf %8, %8 : vector<1x8xf32>
    %12 = arith.addf %10, %11 : vector<1x8xf32>
    %cst = arith.constant dense<0.000000e+00> : vector<8xf32>
    %13 = vector.multi_reduction <add>, %12, %cst [0] : vector<1x8xf32> to vector<8xf32>
    %14 = vector.shape_cast %13 : vector<8xf32> to vector<1x8xf32>
    %15 = arith.addf %9, %14 : vector<1x8xf32>
    %c0_10 = arith.constant 0 : index
    %c0_11 = arith.constant 0 : index
    %16 = vector.load %arg6[%c0_10, %c0_11] : memref<1x8xf32, #tpu.memory_space<vmem>>, vector<1x8xf32>
    tpu.vector_store %arg6[%c0_10, %c0_11], %15 {strides = array<i32>} : memref<1x8xf32, #tpu.memory_space<vmem>>, vector<1x8xf32>,
    %c0_i32_12 = arith.constant 0 : i32
    %17 = arith.cmpi eq, %arg0, %c0_i32_12 : i32
    %18 = arith.extui %17 : i1 to i32
    %c0_i32_13 = arith.constant 0 : i32
    %19 = arith.cmpi ne, %18, %c0_i32_13 : i32
    scf.if %19 {
      %c0_14 = arith.constant 0 : index
      %c0_15 = arith.constant 0 : index
      %20 = vector.load %arg6[%c0_14, %c0_15] : memref<1x8xf32, #tpu.memory_space<vmem>>, vector<1x8xf32>
      %21 = vector.shape_cast %20 : vector<1x8xf32> to vector<1x1x8xf32>
      %cst_16 = arith.constant dense<0.000000e+00> : vector<1xf32>
      %22 = vector.multi_reduction <add>, %21, %cst_16 [1, 2] : vector<1x1x8xf32> to vector<1xf32>
      %23 = vector.shape_cast %22 : vector<1xf32> to vector<1x1x1xf32>
      %24 = vector.extract %23[0, 0, 0] : f32 from vector<1x1x1xf32>
      %25 = vector.broadcast %24 : f32 to vector<1x1xf32>
      %cst_17 = arith.constant 1.250000e-01 : f32
      %26 = vector.broadcast %cst_17 : f32 to vector<1x1xf32>
      %27 = arith.mulf %25, %26 : vector<1x1xf32>
      %c0_18 = arith.constant 0 : index
      %c0_19 = arith.constant 0 : index
      %28 = vector.load %arg5[%c0_18, %c0_19] : memref<1x1xf32, #tpu.memory_space<vmem>>, vector<1x1xf32>
      tpu.vector_store %arg5[%c0_18, %c0_19], %27 {strides = array<i32>} : memref<1x1xf32, #tpu.memory_space<vmem>>, vector<1x1xf32>,
    } else {
    }
    return
  }
  func.func @transform_0(%arg0: i32) -> (i32, i32) {
    %c0_i32 = arith.constant 0 : i32
    %c0_i32_0 = arith.constant 0 : i32
    return %arg0, %c0_i32 : i32, i32
  }
  func.func @transform_1(%arg0: i32) -> (i32, i32) {
    %c0_i32 = arith.constant 0 : i32
    %c0_i32_0 = arith.constant 0 : i32
    return %arg0, %c0_i32 : i32, i32
  }
  func.func @transform_2(%arg0: i32) -> (i32, i32) {
    %c0_i32 = arith.constant 0 : i32
    %c0_i32_0 = arith.constant 0 : i32
    return %arg0, %c0_i32 : i32, i32
  }
  func.func @transform_3(%arg0: i32) -> (i32, i32) {
    %c0_i32 = arith.constant 0 : i32
    %c0_i32_0 = arith.constant 0 : i32
    return %arg0, %c0_i32 : i32, i32
  }
  func.func @transform_4(%arg0: i32) -> (i32, i32) {
    %c0_i32 = arith.constant 0 : i32
    %c0_i32_0 = arith.constant 0 : i32
    %c0_i32_1 = arith.constant 0 : i32
    return %c0_i32, %c0_i32_0 : i32, i32
  }
}

</mosaic_0001>

<llo_original>
// kernel: tpu_custom_call.1
$region0: #{tpu_custom_call.1}
  #allocation0 [shape = 'u32[]', space=smem, size = 0x4, offset = 0x4, fixed_abs, tag = 'smem constant byte address 0x4 - core index']
  #allocation1 [shape = 'u32[72,128]{1,0:T(1,128)}', space=vmem, size = 0x9000, scoped, tag = 'internal scratch']
  #allocation2 [shape = 'f32[1,8]{1,0:T(1,128)}', space=vmem, size = 0x200, scoped, tag = 'scratch operand']
  %s0 = inlined_call_operand.hbm [shape: f32[1,8], index: 0, kind: input, shape index: {}]
  %s1 = inlined_call_operand.hbm [shape: f32[1,8], index: 1, kind: input, shape index: {}]
  %s2 = inlined_call_operand.vmem [shape: f32[1,8], index: 2, kind: input, shape index: {}]
  %s3 = inlined_call_operand.vmem [shape: f32[1,8], index: 3, kind: input, shape index: {}]
  %s4 = inlined_call_operand.hbm [shape: f32[1,1], index: 4, kind: output, shape index: {}]
  %s5 = sld [smem:[#allocation0]]
  $region42: #{tpu_custom_call.1} parent=0
    _
  %s7 = ssub.s32 1, %s5
  %s8 = scalar_select 0, %s7, %s5
  $region1: #{tpu_custom_call.1} parent=0
    #allocation3 [shape = 'u8[512]{0}', space=vmem, size = 0x400, scoped, tag = 'input window, operand 0, single buffered']
    #allocation4 [shape = 's32[1]{0}', space=sflag, size = 0x4, scoped, tag = 'scoped memory for tpu_custom_call.1']
    #allocation5 [shape = 's32[1]{0}', space=sflag, size = 0x4, scoped, tag = 'scoped memory for tpu_custom_call.1']
    #allocation6 [shape = 'u8[512]{0}', space=vmem, size = 0x400, scoped, tag = 'input window, operand 1, single buffered']
    #allocation7 [shape = 's32[1]{0}', space=sflag, size = 0x4, scoped, tag = 'scoped memory for tpu_custom_call.1']
    #allocation8 [shape = 'u8[512]{0}', space=vmem, size = 0x400, scoped, tag = 'output window, operand 0, single buffered']
    %9 = vsyncpa [#allocation4], 0
    %10 = vsyncpa [#allocation7], 0
    %11 = vsyncpa [#allocation5], 0
    // Predicated region
    $region2: #{tpu_custom_call.1} parent=1 // pred_check
      _
    $region3: #{tpu_custom_call.1} parent=1 // pred_check_branch
      %13 = sbr.rel (0) target = $region5
    $region4: #{tpu_custom_call.1} parent=1 // pred_region
      %15 = vsyncadd [#allocation4], 0
      %s17 = sshll.u32 %s0, 4
      %s18 = int_to_ptr.hbm [resolvable:$true] %s17
      %s19 = sshll.u32 [#allocation3], 4
      %s20 = int_to_ptr.vmem [resolvable:$true] %s19
      %22 = dma.hbm_to_vmem [thread:$0]  %s18, 16, %s20, [#allocation4]
    $region5: #{tpu_custom_call.1} parent=1 // pred_fallthru
      _
    // Predicated region
    $region6: #{tpu_custom_call.1} parent=1 // pred_check
      _
    $region7: #{tpu_custom_call.1} parent=1 // pred_check_branch
      %24 = sbr.rel (0) target = $region9
    $region8: #{tpu_custom_call.1} parent=1 // pred_region
      %26 = vsyncadd [#allocation7], 0
      %s28 = sshll.u32 %s1, 4
      %s29 = int_to_ptr.hbm [resolvable:$true] %s28
      %s30 = sshll.u32 [#allocation6], 4
      %s31 = int_to_ptr.vmem [resolvable:$true] %s30
      %33 = dma.hbm_to_vmem [thread:$0]  %s29, 16, %s31, [#allocation7]
    $region9: #{tpu_custom_call.1} parent=1 // pred_fallthru
      _
    // Predicated region
    $region10: #{tpu_custom_call.1} parent=1 // pred_check
      _
    $region11: #{tpu_custom_call.1} parent=1 // pred_check_branch
      %35 = sbr.rel (0) target = $region13
    $region12: #{tpu_custom_call.1} parent=1 // pred_region
      _
    $region13: #{tpu_custom_call.1} parent=1 // pred_fallthru
      _
    // Predicated region
    $region14: #{tpu_custom_call.1} parent=1 // pred_check
      _
    $region15: #{tpu_custom_call.1} parent=1 // pred_check_branch
      %37 = sbr.rel (0) target = $region17
    $region16: #{tpu_custom_call.1} parent=1 // pred_region
      _
    $region17: #{tpu_custom_call.1} parent=1 // pred_fallthru
      _
    // Predicated region
    $region18: #{tpu_custom_call.1} parent=1 // pred_check
      _
    $region19: #{tpu_custom_call.1} parent=1 // pred_check_branch
      %39 = sbr.rel (0) target = $region21
    $region20: #{tpu_custom_call.1} parent=1 // pred_region
      %41 = dma.done [#allocation4], 16
    $region21: #{tpu_custom_call.1} parent=1 // pred_fallthru
      _
    // Predicated region
    $region22: #{tpu_custom_call.1} parent=1 // pred_check
      _
    $region23: #{tpu_custom_call.1} parent=1 // pred_check_branch
      %43 = sbr.rel (0) target = $region25
    $region24: #{tpu_custom_call.1} parent=1 // pred_region
      %45 = dma.done [#allocation7], 16
    $region25: #{tpu_custom_call.1} parent=1 // pred_fallthru
      _
    %p46 = scmp.eq.s32.totalorder 0, 0
    // Predicated region
    $region26: #{tpu_custom_call.1} parent=1 // pred_check
      %p47 = pneg %p46
    $region27: #{tpu_custom_call.1} parent=1 // pred_check_branch
      %49 = sbr.rel (%p47) target = $region29
    $region28: #{tpu_custom_call.1} parent=1 // pred_region
      %vm50 = vcmask 57344
      %51 = vst.msk [vmem:[#allocation2] sm:$0x1] %vm50, 0.0
    $region29: #{tpu_custom_call.1} parent=1 // pred_fallthru
      _
    %v52 = vld [vmem:[#allocation3] sm:$0x1]
    %v53 = vld [vmem:[%s2] sm:$0x1]
    %v54 = vsub.f32 %v52, %v53
    %v55 = vld [vmem:[#allocation6] sm:$0x1]
    %v56 = vld [vmem:[%s3] sm:$0x1]
    %v57 = vsub.f32 %v55, %v56
    %v58 = vld [vmem:[#allocation2] sm:$0x1]
    %v59 = vmul.f32 %v54, %v54
    %v60 = vmul.f32 %v57, %v57
    %v61 = vadd.f32 %v59, %v60
    %v62 = vadd.f32 %v61, 0.0
    %v63 = vadd.f32 %v58, %v62
    %vm64 = vcmask 57344
    %65 = vst.msk [vmem:[#allocation2] sm:$0x1] %vm64, %v63
    // Predicated region
    $region30: #{tpu_custom_call.1} parent=1 // pred_check
      %p66 = pneg %p46
    $region31: #{tpu_custom_call.1} parent=1 // pred_check_branch
      %68 = sbr.rel (%p66) target = $region33
    $region32: #{tpu_custom_call.1} parent=1 // pred_region
      %v69 = vld [vmem:[#allocation2] sm:$0x1]
      %v70 = vsel %vm64, %v69, 0.0
      %71 = vadd.xlane.f32.xlu0 %v70
      %v72 = vpop.xlane.xlu0 %71
      %v73 = vrot.slane %v72, 4
      %v74 = vadd.f32 %v72, %v73
      %v75 = vrot.slane %v74, 2
      %v76 = vadd.f32 %v74, %v75
      %v77 = vrot.slane %v76, 1
      %v78 = vadd.f32 %v76, %v77
      %s79 = vtos %v78
      %v80 = vstv %s79
      %v81 = vmul.f32 %v80, 0.125
      %vm82 = vcmask 0
      %83 = vst.msk [vmem:[#allocation8] sm:$0x1] %vm82, %v81
    $region33: #{tpu_custom_call.1} parent=1 // pred_fallthru
      _
    // Predicated region
    $region34: #{tpu_custom_call.1} parent=1 // pred_check
      _
    $region35: #{tpu_custom_call.1} parent=1 // pred_check_branch
      %85 = sbr.rel (0) target = $region37
    $region36: #{tpu_custom_call.1} parent=1 // pred_region
      %87 = vsyncadd [#allocation5], 0
      %s89 = sshll.u32 [#allocation8], 4
      %s90 = int_to_ptr.vmem [resolvable:$true] %s89
      %s91 = sshll.u32 %s4, 4
      %s92 = int_to_ptr.hbm [resolvable:$true] %s91
      %94 = dma.vmem_to_hbm [thread:$0]  %s90, 16, %s92, [#allocation5]
    $region37: #{tpu_custom_call.1} parent=1 // pred_fallthru
      _
    // Predicated region
    $region38: #{tpu_custom_call.1} parent=1 // pred_check
      _
    $region39: #{tpu_custom_call.1} parent=1 // pred_check_branch
      %96 = sbr.rel (0) target = $region41
    $region40: #{tpu_custom_call.1} parent=1 // pred_region
      %98 = dma.done [#allocation5], 16
    $region41: #{tpu_custom_call.1} parent=1 // pred_fallthru
      _
    %99 = vsyncpa [#allocation4], 1
    %100 = vsyncpa [#allocation7], 1
    %101 = vsyncpa [#allocation5], 1

</llo_original>
